<compile_context>
chip_gen: v5e
topology: v5e:2x2
jax: 0.10.0
libtpu: 0.0.40
codegen_flags: <defaults>
</compile_context>

<pallas_src>
import numpy as np
import jax
import jax.numpy as jnp
from jax.experimental import pallas as pl
from jax.experimental.pallas import tpu as pltpu

PR = 2.5          # rgem LPPool2d norm
RSIZE = 5         # rgem window size
GEM_P = 4.6       # gemp power
GEM_EPS = 1e-8    # gemp clamp eps
BN_EPS = 1e-5     # BatchNorm1d eps (eval mode, running stats)
NORM_EPS = 1e-12  # F.normalize eps


def _channel_tile(C, target=512):
    """Channel block for rgem: full C for small/odd C, a 128-multiple otherwise."""
    if C % 128 != 0:
        return C
    cb = min(target, C)
    while C % cb:
        cb -= 128
    return cb


# ----------------------------- rgem kernel ----------------------------------
def rgem_kernel(xpad_ref, o_ref):
    # xpad_ref: (1, H+4, W+4, Cb) reflection-padded RAW features (NHWC, C on lanes).
    H, W = o_ref.shape[1], o_ref.shape[2]
    xp = xpad_ref[0]                               # (H+4, W+4, Cb), >= 0 (post-ReLU)
    xpr = xp * xp * jnp.sqrt(xp)                   # x**2.5 : 2 VALU muls + 1 EUP sqrt

    # Separable 5x5 window sum: width (sublane axis) first, then height (outer axis).
    row = xpr[:, 0:W, :]
    for j in range(1, RSIZE):
        row = row + xpr[:, j:j + W, :]             # (H+4, W, Cb)  (5 sublane-offset adds)
    acc = row[0:H]
    for i in range(1, RSIZE):
        acc = acc + row[i:i + H]                   # (H, W, Cb)    (outer-dim adds, no realign)

    # LPPool2d(2.5, 5, stride=1) applied to x/nominater  ==  (mean_{5x5} x^2.5)^(1/2.5)
    lp = jnp.exp((1.0 / PR) *
                 jnp.log(jnp.maximum(acc * (1.0 / (RSIZE * RSIZE)), 1e-30)))
    o_ref[0] = 0.5 * lp + 0.5 * xp[2:2 + H, 2:2 + W, :]   # centre recovered from the pad


def rgem_pallas(x_nhwc):
    B, H, W, C = x_nhwc.shape
    # No /nominater pass in the wrapper: it folds into the mean inside the kernel.
    xpad = jnp.pad(x_nhwc, ((0, 0), (2, 2), (2, 2), (0, 0)), mode="reflect")
    cb = _channel_tile(C)
    return pl.pallas_call(
        rgem_kernel,
        out_shape=jax.ShapeDtypeStruct((B, H, W, C), jnp.float32),
        grid=(B, C // cb),
        in_specs=[pl.BlockSpec((1, H + 4, W + 4, cb), lambda b, c: (b, 0, 0, c))],
        out_specs=pl.BlockSpec((1, H, W, cb), lambda b, c: (b, 0, 0, c)),
        compiler_params=pltpu.CompilerParams(
            dimension_semantics=("parallel", "parallel"),
            vmem_limit_bytes=32 * 1024 * 1024),
    )(xpad)


# ---------------- non-local block + gemp + normalize + fc head --------------
def head_kernel(x_ref, gw_ref, gb_ref, tw_ref, tb_ref, pw_ref, pb_ref,
                Ww_ref, Wb_ref, bns_ref, bnb_ref, fw_ref, fb_ref, o_ref):
    x = x_ref[0]                                   # (T, C) f32
    m, nc = o_ref.shape[1], o_ref.shape[2]
    bf = jnp.bfloat16
    xb = x.astype(bf)

    # 1x1 Conv1d projections, channels-last: (T,C) @ (C,Ci) on bf16, f32 accumulation.
    g = jnp.dot(xb, gw_ref[...], preferred_element_type=jnp.float32) + gb_ref[...]
    th = jnp.dot(xb, tw_ref[...], preferred_element_type=jnp.float32) + tb_ref[...]
    ph = jnp.dot(xb, pw_ref[...], preferred_element_type=jnp.float32) + pb_ref[...]

    # Attention scores f[t,s] = sum_c th[t,c]*ph[s,c]  (no explicit transpose).
    f = jax.lax.dot_general(th.astype(bf), ph.astype(bf),
                            (((1,), (1,)), ((), ())),
                            preferred_element_type=jnp.float32)            # (T, T)
    f = f - jnp.max(f, axis=-1, keepdims=True)
    e = jnp.exp(f)
    fsm = e * pl.reciprocal(jnp.sum(e, axis=-1, keepdims=True), approx=True)

    y = jnp.dot(fsm.astype(bf), g.astype(bf),
                preferred_element_type=jnp.float32)                        # (T, Ci)
    wy = jnp.dot(y.astype(bf), Ww_ref[...],
                 preferred_element_type=jnp.float32) + Wb_ref[...]         # (T, C)

    # Residual + folded BatchNorm1d (eval mode): z = (wy + x) * scale + shift.
    z = (wy + x) * bns_ref[...] + bnb_ref[...]

    # GeM pool over T (axis 0, no transpose): (mean clamp(z)^p)^(1/p)  -> (1, C)
    zp = jnp.exp(GEM_P * jnp.log(jnp.maximum(z, GEM_EPS)))
    pooled = jnp.exp((1.0 / GEM_P) *
                     jnp.log(jnp.maximum(jnp.mean(zp, axis=0, keepdims=True), 1e-30)))

    # F.normalize(p=2, dim=-1) on the single pooled row (gemp's m rows are identical).
    nrm = jnp.sqrt(jnp.sum(pooled * pooled, axis=-1, keepdims=True))
    feat = pooled * pl.reciprocal(jnp.maximum(nrm, NORM_EPS), approx=True)

    # GlobalHead.fc — tiny (1,C)@(C,nc), kept in f32 — then broadcast to the m rows.
    row = jnp.dot(feat, fw_ref[...], preferred_element_type=jnp.float32) + fb_ref[...]
    o_ref[0] = jnp.broadcast_to(row, (m, nc))


def prepare_head_params(p):
    """Fold BN, transpose weights for channels-last matmuls, cast big weights to bf16."""
    bf = jnp.bfloat16
    bn_scale = p["bn_g"] * (1.0 / jnp.sqrt(p["bn_v"] + BN_EPS))       # (C, 1)
    bn_shift = p["bn_b"] - p["bn_m"] * bn_scale                       # (C, 1)
    return {
        "m": p["m"],
        "gw": p["g_w"].T.astype(bf), "gb": p["g_b"].reshape(1, -1),
        "tw": p["theta_w"].T.astype(bf), "tb": p["theta_b"].reshape(1, -1),
        "pw": p["phi_w"].T.astype(bf), "pb": p["phi_b"].reshape(1, -1),
        "Ww": p["W_w"].T.astype(bf), "Wb": p["W_b"].reshape(1, -1),
        "bns": bn_scale.reshape(1, -1), "bnb": bn_shift.reshape(1, -1),
        "fw": p["fc_w"].T, "fb": p["fc_b"].reshape(1, -1),
    }


def nonlocal_gem_head(x_btc, kp):
    B, T, C = x_btc.shape
    Ci = kp["gw"].shape[1]
    m = kp["m"]
    nc = kp["fw"].shape[1]

    def full(shape):
        return pl.BlockSpec(shape, lambda b, _n=len(shape): (0,) * _n)

    return pl.pallas_call(
        head_kernel,
        out_shape=jax.ShapeDtypeStruct((B, m, nc), jnp.float32),
        grid=(B,),
        in_specs=[
            pl.BlockSpec((1, T, C), lambda b: (b, 0, 0)),
            full((C, Ci)), full((1, Ci)),
            full((C, Ci)), full((1, Ci)),
            full((C, Ci)), full((1, Ci)),
            full((Ci, C)), full((1, C)),
            full((1, C)), full((1, C)),
            full((C, nc)), full((1, nc)),
        ],
        out_specs=pl.BlockSpec((1, m, nc), lambda b: (b, 0, 0)),
        compiler_params=pltpu.CompilerParams(
            dimension_semantics=("parallel",),
            vmem_limit_bytes=32 * 1024 * 1024),
    )(x_btc, kp["gw"], kp["gb"], kp["tw"], kp["tb"], kp["pw"], kp["pb"],
      kp["Ww"], kp["Wb"], kp["bns"], kp["bnb"], kp["fw"], kp["fb"])


# --------------------------------- sgem --------------------------------------
def sgem(feature_list):
    x = jnp.stack(feature_list, 0)                 # (S, B, m, nc)
    n = jnp.sqrt(jnp.sum(x * x, axis=-1, keepdims=True))
    x = x / jnp.maximum(n, NORM_EPS)
    return jnp.max(x, axis=0)                      # (B, m, nc)


# ----------------------------- full forward ----------------------------------
def uglobal_forward(feat_nchw, params, scale=1):
    assert scale == 1, "only scale=1 implemented (resize + backbone are external)"
    B, C, H, W = feat_nchw.shape
    kp = prepare_head_params(params)
    feature_list = []
    for _ in [1.0]:
        x_nhwc = jnp.transpose(feat_nchw, (0, 2, 3, 1))
        if H > 2 and W > 2:
            x_nhwc = rgem_pallas(x_nhwc)
        x_btc = x_nhwc.reshape(B, H * W, C)        # channels-last: reshape only, no transpose
        feature_list.append(nonlocal_gem_head(x_btc, kp))
    return sgem(feature_list)


# ----------------------- plain-JAX reference (check) -------------------------
def reference_forward(x_nchw, p):
    B, C, H, W = x_nchw.shape
    m = p["m"]
    nom = (RSIZE ** 2) ** (1.0 / PR)
    pad = jnp.pad(x_nchw / nom, ((0, 0), (0, 0), (2, 2), (2, 2)), mode="reflect")
    xp = jnp.power(pad, PR)
    acc = jnp.zeros_like(x_nchw)
    for i in range(RSIZE):
        for j in range(RSIZE):
            acc = acc + xp[:, :, i:i + H, j:j + W]
    out = 0.5 * jnp.power(acc, 1.0 / PR) + 0.5 * x_nchw
    xf = out.reshape(B, C, H * W)

    conv1 = lambda w, b, t: jnp.einsum("oc,bct->bot", w, t) + b.reshape(1, -1, 1)
    g = conv1(p["g_w"], p["g_b"], xf)
    th = conv1(p["theta_w"], p["theta_b"], xf)
    ph = conv1(p["phi_w"], p["phi_b"], xf)
    f = jnp.einsum("bct,bcs->bts", th, ph)
    fsm = jax.nn.softmax(f, axis=-1)
    y = jnp.einsum("bts,bcs->btc", fsm, g)
    wy = jnp.einsum("oc,btc->bot", p["W_w"], y) + p["W_b"].reshape(1, -1, 1)
    z = wy + xf
    z = (z - p["bn_m"].reshape(1, -1, 1)) / jnp.sqrt(p["bn_v"].reshape(1, -1, 1) + BN_EPS) \
        * p["bn_g"].reshape(1, -1, 1) + p["bn_b"].reshape(1, -1, 1)
    zp = jnp.power(jnp.maximum(z, GEM_EPS), GEM_P)
    pooled = jnp.power(jnp.mean(zp, axis=-1, keepdims=True), 1.0 / GEM_P)
    feat = jnp.transpose(jnp.broadcast_to(pooled, (B, C, m)), (0, 2, 1))
    nrm = jnp.sqrt(jnp.sum(feat * feat, -1, keepdims=True))
    feat = feat / jnp.maximum(nrm, NORM_EPS)
    fc = jnp.einsum("bmc,nc->bmn", feat, p["fc_w"]) + p["fc_b"].reshape(1, 1, -1)
    nrm2 = jnp.sqrt(jnp.sum(fc * fc, -1, keepdims=True))
    return fc / jnp.maximum(nrm2, NORM_EPS)


# ------------------------------- params ---------------------------------------
def init_params(key, C, m, nc):
    Ci = C // 2
    ks = jax.random.split(key, 10)
    init = lambda k, shape, s=0.1: (s * jax.random.normal(k, shape)).astype(jnp.float32)
    return {
        "m": m,
        "g_w": init(ks[0], (Ci, C)), "g_b": init(ks[1], (Ci, 1)),
        "theta_w": init(ks[2], (Ci, C)), "theta_b": init(ks[3], (Ci, 1)),
        "phi_w": init(ks[4], (Ci, C)), "phi_b": init(ks[5], (Ci, 1)),
        "W_w": init(ks[6], (C, Ci)), "W_b": init(ks[7], (C, 1)),
        # BatchNorm1d defaults (eval mode): gamma=1, beta=0, running stats (0, 1)
        "bn_g": jnp.ones((C, 1), jnp.float32),
        "bn_b": jnp.zeros((C, 1), jnp.float32),
        "bn_m": jnp.zeros((C, 1), jnp.float32),
        "bn_v": jnp.ones((C, 1), jnp.float32),
        "fc_w": init(ks[8], (nc, C)), "fc_b": init(ks[9], (1, nc)),
    }


if __name__ == "__main__":
    config = {"n_labels": 10, "reduction_dim": 8, "model": "resnet101"}
    B, C, H, W = 2, 32, 8, 8            # toy backbone feature map (2048 -> 32 channels)
    m = nc = config["reduction_dim"]

    key = jax.random.PRNGKey(0)
    kx, kp = jax.random.split(key)
    # post-ReLU backbone features are non-negative
    x = jax.nn.relu(jax.random.normal(kx, (B, C, H, W), jnp.float32))
    params = init_params(kp, C, m, nc)

    out = uglobal_forward(x, params, scale=1)
    out = jax.block_until_ready(out)
    assert out.shape == (B, m, nc)

    ref = reference_forward(x, params)
    # Tolerance widened vs the pure-f32 version: matmuls now feed the MXU in bf16
    # (f32 accumulation) and softmax/L2 use the approximate EUP reciprocal.
    np.testing.assert_allclose(np.asarray(out), np.asarray(ref), rtol=2e-2, atol=2e-2)
    print("KERNEL_OK")
</pallas_src>

<mosaic_0001>
module attributes {stable_mosaic.version = 11 : i64} {
  func.func @rgem_kernel(%arg0: i32, %arg1: i32, %arg2: memref<1x12x12x32xf32, #tpu.memory_space<vmem>>, %arg3: memref<1x8x8x32xf32, #tpu.memory_space<vmem>>) attributes {dimension_semantics = [#tpu.dimension_semantics<parallel>, #tpu.dimension_semantics<parallel>], iteration_bounds = array<i64: 2, 1>, scalar_prefetch = 0 : i64, scratch_operands = 0 : i64, tpu.core_type = #tpu.core_type<tc>, window_params = [{transform_indices = @transform_0, window_bounds = array<i64: 1, 12, 12, 32>}, {transform_indices = @transform_1, window_bounds = array<i64: 1, 8, 8, 32>}]} {
    %c0 = arith.constant 0 : index
    %c0_0 = arith.constant 0 : index
    %c0_1 = arith.constant 0 : index
    %c0_2 = arith.constant 0 : index
    %0 = vector.load %arg2[%c0, %c0_0, %c0_1, %c0_2] : memref<1x12x12x32xf32, #tpu.memory_space<vmem>>, vector<1x12x12x32xf32>
    %1 = vector.shape_cast %0 : vector<1x12x12x32xf32> to vector<12x12x32xf32>
    %2 = arith.mulf %1, %1 : vector<12x12x32xf32>
    %3 = math.sqrt %1 : vector<12x12x32xf32>
    %4 = arith.mulf %2, %3 : vector<12x12x32xf32>
    %5 = vector.extract_strided_slice %4 {offsets = [0, 0, 0], sizes = [12, 8, 32], strides = [1, 1, 1]} : vector<12x12x32xf32> to vector<12x8x32xf32>
    %6 = vector.extract_strided_slice %4 {offsets = [0, 1, 0], sizes = [12, 8, 32], strides = [1, 1, 1]} : vector<12x12x32xf32> to vector<12x8x32xf32>
    %7 = arith.addf %5, %6 : vector<12x8x32xf32>
    %8 = vector.extract_strided_slice %4 {offsets = [0, 2, 0], sizes = [12, 8, 32], strides = [1, 1, 1]} : vector<12x12x32xf32> to vector<12x8x32xf32>
    %9 = arith.addf %7, %8 : vector<12x8x32xf32>
    %10 = vector.extract_strided_slice %4 {offsets = [0, 3, 0], sizes = [12, 8, 32], strides = [1, 1, 1]} : vector<12x12x32xf32> to vector<12x8x32xf32>
    %11 = arith.addf %9, %10 : vector<12x8x32xf32>
    %12 = vector.extract_strided_slice %4 {offsets = [0, 4, 0], sizes = [12, 8, 32], strides = [1, 1, 1]} : vector<12x12x32xf32> to vector<12x8x32xf32>
    %13 = arith.addf %11, %12 : vector<12x8x32xf32>
    %14 = vector.extract_strided_slice %13 {offsets = [0, 0, 0], sizes = [8, 8, 32], strides = [1, 1, 1]} : vector<12x8x32xf32> to vector<8x8x32xf32>
    %15 = vector.extract_strided_slice %13 {offsets = [1, 0, 0], sizes = [8, 8, 32], strides = [1, 1, 1]} : vector<12x8x32xf32> to vector<8x8x32xf32>
    %16 = arith.addf %14, %15 : vector<8x8x32xf32>
    %17 = vector.extract_strided_slice %13 {offsets = [2, 0, 0], sizes = [8, 8, 32], strides = [1, 1, 1]} : vector<12x8x32xf32> to vector<8x8x32xf32>
    %18 = arith.addf %16, %17 : vector<8x8x32xf32>
    %19 = vector.extract_strided_slice %13 {offsets = [3, 0, 0], sizes = [8, 8, 32], strides = [1, 1, 1]} : vector<12x8x32xf32> to vector<8x8x32xf32>
    %20 = arith.addf %18, %19 : vector<8x8x32xf32>
    %21 = vector.extract_strided_slice %13 {offsets = [4, 0, 0], sizes = [8, 8, 32], strides = [1, 1, 1]} : vector<12x8x32xf32> to vector<8x8x32xf32>
    %22 = arith.addf %20, %21 : vector<8x8x32xf32>
    %cst = arith.constant 4.000000e-02 : f32
    %23 = vector.broadcast %cst : f32 to vector<8x8x32xf32>
    %24 = arith.mulf %22, %23 : vector<8x8x32xf32>
    %cst_3 = arith.constant 1.000000e-30 : f32
    %25 = vector.broadcast %cst_3 : f32 to vector<8x8x32xf32>
    %26 = arith.maximumf %24, %25 : vector<8x8x32xf32>
    %27 = math.log %26 : vector<8x8x32xf32>
    %cst_4 = arith.constant 4.000000e-01 : f32
    %28 = vector.broadcast %cst_4 : f32 to vector<8x8x32xf32>
    %29 = arith.mulf %28, %27 : vector<8x8x32xf32>
    %30 = math.exp %29 : vector<8x8x32xf32>
    %cst_5 = arith.constant 5.000000e-01 : f32
    %31 = vector.broadcast %cst_5 : f32 to vector<8x8x32xf32>
    %32 = arith.mulf %31, %30 : vector<8x8x32xf32>
    %33 = vector.extract_strided_slice %1 {offsets = [2, 2, 0], sizes = [8, 8, 32], strides = [1, 1, 1]} : vector<12x12x32xf32> to vector<8x8x32xf32>
    %cst_6 = arith.constant 5.000000e-01 : f32
    %34 = vector.broadcast %cst_6 : f32 to vector<8x8x32xf32>
    %35 = arith.mulf %34, %33 : vector<8x8x32xf32>
    %36 = arith.addf %32, %35 : vector<8x8x32xf32>
    %c0_7 = arith.constant 0 : index
    %c0_8 = arith.constant 0 : index
    %c0_9 = arith.constant 0 : index
    %c0_10 = arith.constant 0 : index
    %37 = vector.load %arg3[%c0_7, %c0_8, %c0_9, %c0_10] : memref<1x8x8x32xf32, #tpu.memory_space<vmem>>, vector<1x8x8x32xf32>
    %38 = vector.shape_cast %37 : vector<1x8x8x32xf32> to vector<8x8x32xf32>
    %39 = vector.shape_cast %36 : vector<8x8x32xf32> to vector<1x8x8x32xf32>
    tpu.vector_store %arg3[%c0_7, %c0_8, %c0_9, %c0_10], %39 {strides = array<i32>} : memref<1x8x8x32xf32, #tpu.memory_space<vmem>>, vector<1x8x8x32xf32>,
    return
  }
  func.func @transform_0(%arg0: i32, %arg1: i32) -> (i32, i32, i32, i32) {
    %c0_i32 = arith.constant 0 : i32
    %c0_i32_0 = arith.constant 0 : i32
    %c0_i32_1 = arith.constant 0 : i32
    return %arg0, %c0_i32, %c0_i32_0, %arg1 : i32, i32, i32, i32
  }
  func.func @transform_1(%arg0: i32, %arg1: i32) -> (i32, i32, i32, i32) {
    %c0_i32 = arith.constant 0 : i32
    %c0_i32_0 = arith.constant 0 : i32
    %c0_i32_1 = arith.constant 0 : i32
    return %arg0, %c0_i32, %c0_i32_0, %arg1 : i32, i32, i32, i32
  }
}

</mosaic_0001>

<llo_original>
// kernel: tpu_custom_call.1
$region0: #{tpu_custom_call.1}
  #allocation0 [shape = 'u32[]', space=smem, size = 0x4, offset = 0x4, fixed_abs, tag = 'smem constant byte address 0x4 - core index']
  #allocation1 [shape = 'u32[72,128]{1,0:T(1,128)}', space=vmem, size = 0x9000, scoped, tag = 'internal scratch']
  %s0 = inlined_call_operand.vmem [shape: f32[2,12,12,32], index: 0, kind: input, shape index: {}]
  %s1 = inlined_call_operand.hbm [shape: f32[2,8,8,32], index: 1, kind: output, shape index: {}]
  %s2 = sld [smem:[#allocation0]]
  $region37: #{tpu_custom_call.1} parent=0
    _
  %s4 = ssub.s32 1, %s2
  %s5 = scalar_select 0, %s4, %s2
  $region1: #{tpu_custom_call.1} parent=0
    #allocation2 [shape = 'u8[65536]{0}', space=vmem, size = 0x10000, scoped, tag = 'output window, operand 0']
    #allocation3 [shape = 's32[2]{0}', space=sflag, size = 0x8, scoped, tag = 'scoped memory for tpu_custom_call.1']
    %6 = vsyncpa [#allocation3], 0
    %s7 = scalar_lea.sflag [#allocation3], 1
    %8 = vsyncpa %s7, 0
    loop: start=0, step=1, limit=4
    $region2: #{tpu_custom_call.1} parent=1 // loop_pre_header
      _
    $region3: #{tpu_custom_call.1} parent=1 // loop_header
      %s10 = sphi 0, %s14
      %p11 = scmp.ge.s32.totalorder %s10, 4
      %s17 = sphi 0, %s29
      %s18 = sphi 0, %s25
      %s19 = sphi 0, %s17
      %s20 = sphi 0, %s18
      %s21 = sphi 0, %s19
      %s22 = sphi 0, %s20
      %s34 = sphi 0, %s36
      %s37 = sphi 0, %s34
      %s38 = sphi 0, %s37
      %s54 = sphi 0, %s38
      %s62 = sphi 0, %s64
      %s65 = sphi 0, %s62
      %s66 = sphi 0, %s65
      %s82 = sphi 0, %s66
    $region4: #{tpu_custom_call.1} parent=1 // loop_header_branch
      %13 = sbr.rel (%p11) target = $region8
    $region5: #{tpu_custom_call.1} parent=1 // loop_body
      %s15 = ssub.s32 %s10, 1
      %s16 = ssub.s32 %s10, 2
      %s23 = sadd.s32 1, %s18
      %p24 = scmp.ge.s32.totalorder %s23, 1
      %s25 = scalar_select %p24, 0, %s23
      %s26 = sadd.s32 1, %s17
      %s27 = scalar_select %p24, %s26, %s17
      %p28 = scmp.ge.s32.totalorder %s27, 2
      %s29 = scalar_select %p28, 0, %s27
      %s30 = ssub.s32 %s17, %s29
      %s31 = ssub.s32 %s18, %s25
      %s32 = sor.u32 %s30, %s31
      %p33 = scmp.eq.s32.totalorder %s32, 0
      %s35 = sadd.s32 %s34, 1
      %s36 = scalar_select %p33, %s34, %s35
      %p39 = pneg %p33
      %p40 = scmp.eq.s32.totalorder %s10, 1
      %p41 = por %p39, %p40
      %p42 = scmp.ne.s32.totalorder %s34, %s37
      %p43 = scmp.eq.s32.totalorder %s10, 0
      %p44 = por %p42, %p43
      %p45 = scmp.ne.s32.totalorder %s34, %s37
      %p46 = scmp.eq.s32.totalorder %s15, 1
      %p47 = por %p45, %p46
      %p48 = scmp.ne.s32.totalorder %s37, %s38
      %p49 = scmp.eq.s32.totalorder %s15, 0
      %p50 = por %p48, %p49
      %p51 = scmp.ne.s32.totalorder %s37, %s38
      %p52 = scmp.eq.s32.totalorder %s16, 1
      %p53 = por %p51, %p52
      %p55 = scmp.ne.s32.totalorder %s38, %s54
      %p56 = scmp.eq.s32.totalorder %s16, 0
      %p57 = por %p55, %p56
      %s58 = ssub.s32 %s17, %s29
      %s59 = ssub.s32 %s18, %s25
      %s60 = sor.u32 %s58, %s59
      %p61 = scmp.eq.s32.totalorder %s60, 0
      %s63 = sadd.s32 %s62, 1
      %s64 = scalar_select %p61, %s62, %s63
      %p67 = pneg %p61
      %p68 = scmp.eq.s32.totalorder %s10, 1
      %p69 = por %p67, %p68
      %p70 = scmp.ne.s32.totalorder %s62, %s65
      %p71 = scmp.eq.s32.totalorder %s10, 0
      %p72 = por %p70, %p71
      %p73 = scmp.ne.s32.totalorder %s62, %s65
      %p74 = scmp.eq.s32.totalorder %s15, 1
      %p75 = por %p73, %p74
      %p76 = scmp.ne.s32.totalorder %s65, %s66
      %p77 = scmp.eq.s32.totalorder %s15, 0
      %p78 = por %p76, %p77
      %p79 = scmp.ne.s32.totalorder %s65, %s66
      %p80 = scmp.eq.s32.totalorder %s16, 1
      %p81 = por %p79, %p80
      %p83 = scmp.ne.s32.totalorder %s66, %s82
      %p84 = scmp.eq.s32.totalorder %s16, 0
      %p85 = por %p83, %p84
      %p86 = scmp.le.s32.totalorder 1, %s10
      %p87 = scmp.lt.s32.totalorder %s10, 3
      %p88 = pnand %p86, %p87
      %p89 = pneg %p88
      // Predicated region
      $region9: #{tpu_custom_call.1} parent=5 // pred_check
        _
      $region10: #{tpu_custom_call.1} parent=5 // pred_check_branch
        %91 = sbr.rel (%p88) target = $region12
      $region11: #{tpu_custom_call.1} parent=5 // pred_region
        %s92 = ssub.s32 %s10, 1
      $region12: #{tpu_custom_call.1} parent=5 // pred_fallthru
        _
      %p93 = scmp.lt.s32.totalorder %s10, 2
      // Predicated region
      $region13: #{tpu_custom_call.1} parent=5 // pred_check
        %p94 = pneg %p93
      $region14: #{tpu_custom_call.1} parent=5 // pred_check_branch
        %96 = sbr.rel (%p94) target = $region16
      $region15: #{tpu_custom_call.1} parent=5 // pred_region
        // Predicated region
        $region17: #{tpu_custom_call.1} parent=15 // pred_check
          %p97 = pneg %p44
        $region18: #{tpu_custom_call.1} parent=15 // pred_check_branch
          %99 = sbr.rel (%p97) target = $region20
        $region19: #{tpu_custom_call.1} parent=15 // pred_region
          %p100 = scmp.lt.s32.totalorder %s17, 1
          %s101 = scalar_select %p100, %s17, 1
          %p102 = scmp.lt.s32.totalorder %s18, 0
          %s103 = scalar_select %p102, %s18, 0
          %s104 = smul.addr %s101, 24
          %s105 = sadd.s32 %s103, %s104
          %s106 = smul.addr %s105, 8
          %s107 = scalar_lea.vmem %s0, %s106
        $region20: #{tpu_custom_call.1} parent=15 // pred_fallthru
          _
      $region16: #{tpu_custom_call.1} parent=5 // pred_fallthru
        _
      %p108 = scmp.le.s32.totalorder 1, %s10
      %p109 = scmp.lt.s32.totalorder %s10, 3
      %p110 = pnand %p108, %p109
      %p111 = pneg %p110
      // Predicated region
      $region21: #{tpu_custom_call.1} parent=5 // pred_check
        _
      $region22: #{tpu_custom_call.1} parent=5 // pred_check_branch
        %113 = sbr.rel (%p110) target = $region24
      $region23: #{tpu_custom_call.1} parent=5 // pred_region
        %s114 = ssub.s32 %s10, 1
        %p115 = scmp.lt.s32.totalorder %s19, 1
        %s116 = scalar_select %p115, %s19, 1
        %p117 = scmp.lt.s32.totalorder %s20, 0
        %s118 = scalar_select %p117, %s20, 0
        %s119 = smul.addr %s116, 24
        %s120 = sadd.s32 %s118, %s119
        %s121 = smul.addr %s120, 8
        %s122 = scalar_lea.vmem %s0, %s121
        %p123 = pneg %p50
        %p124 = pneg %p47
        %p125 = pneg %p78
        %p126 = pneg %p75
        %s127 = sand.u32 %s65, 1
        %s128 = scalar_lea.sflag [#allocation3], %s127
        %s129 = sand.u32 %s65, 1
        %s130 = smul.addr %s129, 64
        %s131 = scalar_lea.vmem [#allocation2], %s130
        %p132 = scmp.lt.s32.totalorder %s19, 1
        %s133 = scalar_select %p132, %s19, 1
        %p134 = scmp.lt.s32.totalorder %s20, 0
        %s135 = scalar_select %p134, %s20, 0
        %s136 = smul.addr %s133, 24
        %s137 = sadd.s32 %s135, %s136
        %s138 = smul.addr %s137, 8
        %s139 = scalar_lea.vmem %s0, %s138
        %v140 = vld [vmem:[%s139] sm:$0xff]
        %v141 = vld [vmem:[%s139 + $0x8] sm:$0xf]
        %v142 = vld [vmem:[%s139 + $0x10] sm:$0xff]
        %v143 = vld [vmem:[%s139 + $0x18] sm:$0xf]
        %v144 = vld [vmem:[%s139 + $0x20] sm:$0xff]
        %v145 = vld [vmem:[%s139 + $0x28] sm:$0xf]
        %v146 = vld [vmem:[%s139 + $0x30] sm:$0xff]
        %v147 = vld [vmem:[%s139 + $0x38] sm:$0xf]
        %v148 = vld [vmem:[%s139 + $0x40] sm:$0xff]
        %v149 = vld [vmem:[%s139 + $0x48] sm:$0xf]
        %v150 = vld [vmem:[%s139 + $0x50] sm:$0xff]
        %v151 = vld [vmem:[%s139 + $0x58] sm:$0xf]
        %v152 = vld [vmem:[%s139 + $0x60] sm:$0xff]
        %v153 = vld [vmem:[%s139 + $0x68] sm:$0xf]
        %v154 = vld [vmem:[%s139 + $0x70] sm:$0xff]
        %v155 = vld [vmem:[%s139 + $0x78] sm:$0xf]
        %v156 = vld [vmem:[%s139 + $0x80] sm:$0xff]
        %v157 = vld [vmem:[%s139 + $0x88] sm:$0xf]
        %v158 = vld [vmem:[%s139 + $0x90] sm:$0xff]
        %v159 = vld [vmem:[%s139 + $0x98] sm:$0xf]
        %v160 = vld [vmem:[%s139 + $0xa0] sm:$0xff]
        %v161 = vld [vmem:[%s139 + $0xa8] sm:$0xf]
        %v162 = vld [vmem:[%s139 + $0xb0] sm:$0xff]
        %v163 = vld [vmem:[%s139 + $0xb8] sm:$0xf]
        %v164 = vmul.f32 %v140, %v140
        %v165 = vmul.f32 %v141, %v141
        %v166 = vmul.f32 %v142, %v142
        %v167 = vmul.f32 %v143, %v143
        %v168 = vmul.f32 %v144, %v144
        %v169 = vmul.f32 %v145, %v145
        %v170 = vmul.f32 %v146, %v146
        %v171 = vmul.f32 %v147, %v147
        %v172 = vmul.f32 %v148, %v148
        %v173 = vmul.f32 %v149, %v149
        %v174 = vmul.f32 %v150, %v150
        %v175 = vmul.f32 %v151, %v151
        %v176 = vmul.f32 %v152, %v152
        %v177 = vmul.f32 %v153, %v153
        %v178 = vmul.f32 %v154, %v154
        %v179 = vmul.f32 %v155, %v155
        %v180 = vmul.f32 %v156, %v156
        %v181 = vmul.f32 %v157, %v157
        %v182 = vmul.f32 %v158, %v158
        %v183 = vmul.f32 %v159, %v159
        %v184 = vmul.f32 %v160, %v160
        %v185 = vmul.f32 %v161, %v161
        %v186 = vmul.f32 %v162, %v162
        %v187 = vmul.f32 %v163, %v163
        %v188 = vrsqrt.pop %v140
        %v189 = vmul.f32 %v188, %v140
        %v190 = vmul.f32 %v189, %v188
        %v191 = vmul.f32 0.5, %v190
        %v192 = vsub.f32 1.5, %v191
        %v193 = vmul.f32 %v188, %v192
        %v194 = vmul.f32 %v140, %v193
        %vm195 = vcmp.eq.f32.partialorder %v140, inf
        %v196 = vsel %vm195, %v140, %v194
        %vm197 = vcmp.eq.f32.partialorder %v140, 0.0
        %v198 = vand.u32 %v140, 2147483648
        %v199 = vsel %vm197, %v198, %v196
        %v200 = vrsqrt.pop %v141
        %v201 = vmul.f32 %v200, %v141
        %v202 = vmul.f32 %v201, %v200
        %v203 = vmul.f32 0.5, %v202
        %v204 = vsub.f32 1.5, %v203
        %v205 = vmul.f32 %v200, %v204
        %v206 = vmul.f32 %v141, %v205
        %vm207 = vcmp.eq.f32.partialorder %v141, inf
        %v208 = vsel %vm207, %v141, %v206
        %vm209 = vcmp.eq.f32.partialorder %v141, 0.0
        %v210 = vand.u32 %v141, 2147483648
        %v211 = vsel %vm209, %v210, %v208
        %v212 = vrsqrt.pop %v142
        %v213 = vmul.f32 %v212, %v142
        %v214 = vmul.f32 %v213, %v212
        %v215 = vmul.f32 0.5, %v214
        %v216 = vsub.f32 1.5, %v215
        %v217 = vmul.f32 %v212, %v216
        %v218 = vmul.f32 %v142, %v217
        %vm219 = vcmp.eq.f32.partialorder %v142, inf
        %v220 = vsel %vm219, %v142, %v218
        %vm221 = vcmp.eq.f32.partialorder %v142, 0.0
        %v222 = vand.u32 %v142, 2147483648
        %v223 = vsel %vm221, %v222, %v220
        %v224 = vrsqrt.pop %v143
        %v225 = vmul.f32 %v224, %v143
        %v226 = vmul.f32 %v225, %v224
        %v227 = vmul.f32 0.5, %v226
        %v228 = vsub.f32 1.5, %v227
        %v229 = vmul.f32 %v224, %v228
        %v230 = vmul.f32 %v143, %v229
        %vm231 = vcmp.eq.f32.partialorder %v143, inf
        %v232 = vsel %vm231, %v143, %v230
        %vm233 = vcmp.eq.f32.partialorder %v143, 0.0
        %v234 = vand.u32 %v143, 2147483648
        %v235 = vsel %vm233, %v234, %v232
        %v236 = vrsqrt.pop %v144
        %v237 = vmul.f32 %v236, %v144
        %v238 = vmul.f32 %v237, %v236
        %v239 = vmul.f32 0.5, %v238
        %v240 = vsub.f32 1.5, %v239
        %v241 = vmul.f32 %v236, %v240
        %v242 = vmul.f32 %v144, %v241
        %vm243 = vcmp.eq.f32.partialorder %v144, inf
        %v244 = vsel %vm243, %v144, %v242
        %vm245 = vcmp.eq.f32.partialorder %v144, 0.0
        %v246 = vand.u32 %v144, 2147483648
        %v247 = vsel %vm245, %v246, %v244
        %v248 = vrsqrt.pop %v145
        %v249 = vmul.f32 %v248, %v145
        %v250 = vmul.f32 %v249, %v248
        %v251 = vmul.f32 0.5, %v250
        %v252 = vsub.f32 1.5, %v251
        %v253 = vmul.f32 %v248, %v252
        %v254 = vmul.f32 %v145, %v253
        %vm255 = vcmp.eq.f32.partialorder %v145, inf
        %v256 = vsel %vm255, %v145, %v254
        %vm257 = vcmp.eq.f32.partialorder %v145, 0.0
        %v258 = vand.u32 %v145, 2147483648
        %v259 = vsel %vm257, %v258, %v256
        %v260 = vrsqrt.pop %v146
        %v261 = vmul.f32 %v260, %v146
        %v262 = vmul.f32 %v261, %v260
        %v263 = vmul.f32 0.5, %v262
        %v264 = vsub.f32 1.5, %v263
        %v265 = vmul.f32 %v260, %v264
        %v266 = vmul.f32 %v146, %v265
        %vm267 = vcmp.eq.f32.partialorder %v146, inf
        %v268 = vsel %vm267, %v146, %v266
        %vm269 = vcmp.eq.f32.partialorder %v146, 0.0
        %v270 = vand.u32 %v146, 2147483648
        %v271 = vsel %vm269, %v270, %v268
        %v272 = vrsqrt.pop %v147
        %v273 = vmul.f32 %v272, %v147
        %v274 = vmul.f32 %v273, %v272
        %v275 = vmul.f32 0.5, %v274
        %v276 = vsub.f32 1.5, %v275
        %v277 = vmul.f32 %v272, %v276
        %v278 = vmul.f32 %v147, %v277
        %vm279 = vcmp.eq.f32.partialorder %v147, inf
        %v280 = vsel %vm279, %v147, %v278
        %vm281 = vcmp.eq.f32.partialorder %v147, 0.0
        %v282 = vand.u32 %v147, 2147483648
        %v283 = vsel %vm281, %v282, %v280
        %v284 = vrsqrt.pop %v148
        %v285 = vmul.f32 %v284, %v148
        %v286 = vmul.f32 %v285, %v284
        %v287 = vmul.f32 0.5, %v286
        %v288 = vsub.f32 1.5, %v287
        %v289 = vmul.f32 %v284, %v288
        %v290 = vmul.f32 %v148, %v289
        %vm291 = vcmp.eq.f32.partialorder %v148, inf
        %v292 = vsel %vm291, %v148, %v290
        %vm293 = vcmp.eq.f32.partialorder %v148, 0.0
        %v294 = vand.u32 %v148, 2147483648
        %v295 = vsel %vm293, %v294, %v292
        %v296 = vrsqrt.pop %v149
        %v297 = vmul.f32 %v296, %v149
        %v298 = vmul.f32 %v297, %v296
        %v299 = vmul.f32 0.5, %v298
        %v300 = vsub.f32 1.5, %v299
        %v301 = vmul.f32 %v296, %v300
        %v302 = vmul.f32 %v149, %v301
        %vm303 = vcmp.eq.f32.partialorder %v149, inf
        %v304 = vsel %vm303, %v149, %v302
        %vm305 = vcmp.eq.f32.partialorder %v149, 0.0
        %v306 = vand.u32 %v149, 2147483648
        %v307 = vsel %vm305, %v306, %v304
        %v308 = vrsqrt.pop %v150
        %v309 = vmul.f32 %v308, %v150
        %v310 = vmul.f32 %v309, %v308
        %v311 = vmul.f32 0.5, %v310
        %v312 = vsub.f32 1.5, %v311
        %v313 = vmul.f32 %v308, %v312
        %v314 = vmul.f32 %v150, %v313
        %vm315 = vcmp.eq.f32.partialorder %v150, inf
        %v316 = vsel %vm315, %v150, %v314
        %vm317 = vcmp.eq.f32.partialorder %v150, 0.0
        %v318 = vand.u32 %v150, 2147483648
        %v319 = vsel %vm317, %v318, %v316
        %v320 = vrsqrt.pop %v151
        %v321 = vmul.f32 %v320, %v151
        %v322 = vmul.f32 %v321, %v320
        %v323 = vmul.f32 0.5, %v322
        %v324 = vsub.f32 1.5, %v323
        %v325 = vmul.f32 %v320, %v324
        %v326 = vmul.f32 %v151, %v325
        %vm327 = vcmp.eq.f32.partialorder %v151, inf
        %v328 = vsel %vm327, %v151, %v326
        %vm329 = vcmp.eq.f32.partialorder %v151, 0.0
        %v330 = vand.u32 %v151, 2147483648
        %v331 = vsel %vm329, %v330, %v328
        %v332 = vrsqrt.pop %v152
        %v333 = vmul.f32 %v332, %v152
        %v334 = vmul.f32 %v333, %v332
        %v335 = vmul.f32 0.5, %v334
        %v336 = vsub.f32 1.5, %v335
        %v337 = vmul.f32 %v332, %v336
        %v338 = vmul.f32 %v152, %v337
        %vm339 = vcmp.eq.f32.partialorder %v152, inf
        %v340 = vsel %vm339, %v152, %v338
        %vm341 = vcmp.eq.f32.partialorder %v152, 0.0
        %v342 = vand.u32 %v152, 2147483648
        %v343 = vsel %vm341, %v342, %v340
        %v344 = vrsqrt.pop %v153
        %v345 = vmul.f32 %v344, %v153
        %v346 = vmul.f32 %v345, %v344
        %v347 = vmul.f32 0.5, %v346
        %v348 = vsub.f32 1.5, %v347
        %v349 = vmul.f32 %v344, %v348
        %v350 = vmul.f32 %v153, %v349
        %vm351 = vcmp.eq.f32.partialorder %v153, inf
        %v352 = vsel %vm351, %v153, %v350
        %vm353 = vcmp.eq.f32.partialorder %v153, 0.0
        %v354 = vand.u32 %v153, 2147483648
        %v355 = vsel %vm353, %v354, %v352
        %v356 = vrsqrt.pop %v154
        %v357 = vmul.f32 %v356, %v154
        %v358 = vmul.f32 %v357, %v356
        %v359 = vmul.f32 0.5, %v358
        %v360 = vsub.f32 1.5, %v359
        %v361 = vmul.f32 %v356, %v360
        %v362 = vmul.f32 %v154, %v361
        %vm363 = vcmp.eq.f32.partialorder %v154, inf
        %v364 = vsel %vm363, %v154, %v362
        %vm365 = vcmp.eq.f32.partialorder %v154, 0.0
        %v366 = vand.u32 %v154, 2147483648
        %v367 = vsel %vm365, %v366, %v364
        %v368 = vrsqrt.pop %v155
        %v369 = vmul.f32 %v368, %v155
        %v370 = vmul.f32 %v369, %v368
        %v371 = vmul.f32 0.5, %v370
        %v372 = vsub.f32 1.5, %v371
        %v373 = vmul.f32 %v368, %v372
        %v374 = vmul.f32 %v155, %v373
        %vm375 = vcmp.eq.f32.partialorder %v155, inf
        %v376 = vsel %vm375, %v155, %v374
        %vm377 = vcmp.eq.f32.partialorder %v155, 0.0
        %v378 = vand.u32 %v155, 2147483648
        %v379 = vsel %vm377, %v378, %v376
        %v380 = vrsqrt.pop %v156
        %v381 = vmul.f32 %v380, %v156
        %v382 = vmul.f32 %v381, %v380
        %v383 = vmul.f32 0.5, %v382
        %v384 = vsub.f32 1.5, %v383
        %v385 = vmul.f32 %v380, %v384
        %v386 = vmul.f32 %v156, %v385
        %vm387 = vcmp.eq.f32.partialorder %v156, inf
        %v388 = vsel %vm387, %v156, %v386
        %vm389 = vcmp.eq.f32.partialorder %v156, 0.0
        %v390 = vand.u32 %v156, 2147483648
        %v391 = vsel %vm389, %v390, %v388
        %v392 = vrsqrt.pop %v157
        %v393 = vmul.f32 %v392, %v157
        %v394 = vmul.f32 %v393, %v392
        %v395 = vmul.f32 0.5, %v394
        %v396 = vsub.f32 1.5, %v395
        %v397 = vmul.f32 %v392, %v396
        %v398 = vmul.f32 %v157, %v397
        %vm399 = vcmp.eq.f32.partialorder %v157, inf
        %v400 = vsel %vm399, %v157, %v398
        %vm401 = vcmp.eq.f32.partialorder %v157, 0.0
        %v402 = vand.u32 %v157, 2147483648
        %v403 = vsel %vm401, %v402, %v400
        %v404 = vrsqrt.pop %v158
        %v405 = vmul.f32 %v404, %v158
        %v406 = vmul.f32 %v405, %v404
        %v407 = vmul.f32 0.5, %v406
        %v408 = vsub.f32 1.5, %v407
        %v409 = vmul.f32 %v404, %v408
        %v410 = vmul.f32 %v158, %v409
        %vm411 = vcmp.eq.f32.partialorder %v158, inf
        %v412 = vsel %vm411, %v158, %v410
        %vm413 = vcmp.eq.f32.partialorder %v158, 0.0
        %v414 = vand.u32 %v158, 2147483648
        %v415 = vsel %vm413, %v414, %v412
        %v416 = vrsqrt.pop %v159
        %v417 = vmul.f32 %v416, %v159
        %v418 = vmul.f32 %v417, %v416
        %v419 = vmul.f32 0.5, %v418
        %v420 = vsub.f32 1.5, %v419
        %v421 = vmul.f32 %v416, %v420
        %v422 = vmul.f32 %v159, %v421
        %vm423 = vcmp.eq.f32.partialorder %v159, inf
        %v424 = vsel %vm423, %v159, %v422
        %vm425 = vcmp.eq.f32.partialorder %v159, 0.0
        %v426 = vand.u32 %v159, 2147483648
        %v427 = vsel %vm425, %v426, %v424
        %v428 = vrsqrt.pop %v160
        %v429 = vmul.f32 %v428, %v160
        %v430 = vmul.f32 %v429, %v428
        %v431 = vmul.f32 0.5, %v430
        %v432 = vsub.f32 1.5, %v431
        %v433 = vmul.f32 %v428, %v432
        %v434 = vmul.f32 %v160, %v433
        %vm435 = vcmp.eq.f32.partialorder %v160, inf
        %v436 = vsel %vm435, %v160, %v434
        %vm437 = vcmp.eq.f32.partialorder %v160, 0.0
        %v438 = vand.u32 %v160, 2147483648
        %v439 = vsel %vm437, %v438, %v436
        %v440 = vrsqrt.pop %v161
        %v441 = vmul.f32 %v440, %v161
        %v442 = vmul.f32 %v441, %v440
        %v443 = vmul.f32 0.5, %v442
        %v444 = vsub.f32 1.5, %v443
        %v445 = vmul.f32 %v440, %v444
        %v446 = vmul.f32 %v161, %v445
        %vm447 = vcmp.eq.f32.partialorder %v161, inf
        %v448 = vsel %vm447, %v161, %v446
        %vm449 = vcmp.eq.f32.partialorder %v161, 0.0
        %v450 = vand.u32 %v161, 2147483648
        %v451 = vsel %vm449, %v450, %v448
        %v452 = vrsqrt.pop %v162
        %v453 = vmul.f32 %v452, %v162
        %v454 = vmul.f32 %v453, %v452
        %v455 = vmul.f32 0.5, %v454
        %v456 = vsub.f32 1.5, %v455
        %v457 = vmul.f32 %v452, %v456
        %v458 = vmul.f32 %v162, %v457
        %vm459 = vcmp.eq.f32.partialorder %v162, inf
        %v460 = vsel %vm459, %v162, %v458
        %vm461 = vcmp.eq.f32.partialorder %v162, 0.0
        %v462 = vand.u32 %v162, 2147483648
        %v463 = vsel %vm461, %v462, %v460
        %v464 = vrsqrt.pop %v163
        %v465 = vmul.f32 %v464, %v163
        %v466 = vmul.f32 %v465, %v464
        %v467 = vmul.f32 0.5, %v466
        %v468 = vsub.f32 1.5, %v467
        %v469 = vmul.f32 %v464, %v468
        %v470 = vmul.f32 %v163, %v469
        %vm471 = vcmp.eq.f32.partialorder %v163, inf
        %v472 = vsel %vm471, %v163, %v470
        %vm473 = vcmp.eq.f32.partialorder %v163, 0.0
        %v474 = vand.u32 %v163, 2147483648
        %v475 = vsel %vm473, %v474, %v472
        %v476 = vmul.f32 %v164, %v199
        %v477 = vmul.f32 %v165, %v211
        %v478 = vmul.f32 %v166, %v223
        %v479 = vmul.f32 %v167, %v235
        %v480 = vmul.f32 %v168, %v247
        %v481 = vmul.f32 %v169, %v259
        %v482 = vmul.f32 %v170, %v271
        %v483 = vmul.f32 %v171, %v283
        %v484 = vmul.f32 %v172, %v295
        %v485 = vmul.f32 %v173, %v307
        %v486 = vmul.f32 %v174, %v319
        %v487 = vmul.f32 %v175, %v331
        %v488 = vmul.f32 %v176, %v343
        %v489 = vmul.f32 %v177, %v355
        %v490 = vmul.f32 %v178, %v367
        %v491 = vmul.f32 %v179, %v379
        %v492 = vmul.f32 %v180, %v391
        %v493 = vmul.f32 %v181, %v403
        %v494 = vmul.f32 %v182, %v415
        %v495 = vmul.f32 %v183, %v427
        %v496 = vmul.f32 %v184, %v439
        %v497 = vmul.f32 %v185, %v451
        %v498 = vmul.f32 %v186, %v463
        %v499 = vmul.f32 %v187, %v475
        %vm524 = vcmask 1046528
        %v525 = vrot.slane %v476, 1
        %v526 = vrot.slane %v477, 1
        %v527 = vsel %vm524, %v525, %v526
        %v528 = vrot.slane %v478, 1
        %v529 = vrot.slane %v479, 1
        %v530 = vsel %vm524, %v528, %v529
        %v531 = vrot.slane %v480, 1
        %v532 = vrot.slane %v481, 1
        %v533 = vsel %vm524, %v531, %v532
        %v534 = vrot.slane %v482, 1
        %v535 = vrot.slane %v483, 1
        %v536 = vsel %vm524, %v534, %v535
        %v537 = vrot.slane %v484, 1
        %v538 = vrot.slane %v485, 1
        %v539 = vsel %vm524, %v537, %v538
        %v540 = vrot.slane %v486, 1
        %v541 = vrot.slane %v487, 1
        %v542 = vsel %vm524, %v540, %v541
        %v543 = vrot.slane %v488, 1
        %v544 = vrot.slane %v489, 1
        %v545 = vsel %vm524, %v543, %v544
        %v546 = vrot.slane %v490, 1
        %v547 = vrot.slane %v491, 1
        %v548 = vsel %vm524, %v546, %v547
        %v549 = vrot.slane %v492, 1
        %v550 = vrot.slane %v493, 1
        %v551 = vsel %vm524, %v549, %v550
        %v552 = vrot.slane %v494, 1
        %v553 = vrot.slane %v495, 1
        %v554 = vsel %vm524, %v552, %v553
        %v555 = vrot.slane %v496, 1
        %v556 = vrot.slane %v497, 1
        %v557 = vsel %vm524, %v555, %v556
        %v558 = vrot.slane %v498, 1
        %v559 = vrot.slane %v499, 1
        %v560 = vsel %vm524, %v558, %v559
        %v573 = vadd.f32 %v476, %v527
        %v574 = vadd.f32 %v478, %v530
        %v575 = vadd.f32 %v480, %v533
        %v576 = vadd.f32 %v482, %v536
        %v577 = vadd.f32 %v484, %v539
        %v578 = vadd.f32 %v486, %v542
        %v579 = vadd.f32 %v488, %v545
        %v580 = vadd.f32 %v490, %v548
        %v581 = vadd.f32 %v492, %v551
        %v582 = vadd.f32 %v494, %v554
        %v583 = vadd.f32 %v496, %v557
        %v584 = vadd.f32 %v498, %v560
        %vm585 = vcmask 1045504
        %v586 = vrot.slane %v476, 2
        %v587 = vrot.slane %v477, 2
        %v588 = vsel %vm585, %v586, %v587
        %v589 = vrot.slane %v478, 2
        %v590 = vrot.slane %v479, 2
        %v591 = vsel %vm585, %v589, %v590
        %v592 = vrot.slane %v480, 2
        %v593 = vrot.slane %v481, 2
        %v594 = vsel %vm585, %v592, %v593
        %v595 = vrot.slane %v482, 2
        %v596 = vrot.slane %v483, 2
        %v597 = vsel %vm585, %v595, %v596
        %v598 = vrot.slane %v484, 2
        %v599 = vrot.slane %v485, 2
        %v600 = vsel %vm585, %v598, %v599
        %v601 = vrot.slane %v486, 2
        %v602 = vrot.slane %v487, 2
        %v603 = vsel %vm585, %v601, %v602
        %v604 = vrot.slane %v488, 2
        %v605 = vrot.slane %v489, 2
        %v606 = vsel %vm585, %v604, %v605
        %v607 = vrot.slane %v490, 2
        %v608 = vrot.slane %v491, 2
        %v609 = vsel %vm585, %v607, %v608
        %v610 = vrot.slane %v492, 2
        %v611 = vrot.slane %v493, 2
        %v612 = vsel %vm585, %v610, %v611
        %v613 = vrot.slane %v494, 2
        %v614 = vrot.slane %v495, 2
        %v615 = vsel %vm585, %v613, %v614
        %v616 = vrot.slane %v496, 2
        %v617 = vrot.slane %v497, 2
        %v618 = vsel %vm585, %v616, %v617
        %v619 = vrot.slane %v498, 2
        %v620 = vrot.slane %v499, 2
        %v621 = vsel %vm585, %v619, %v620
        %v634 = vadd.f32 %v573, %v588
        %v635 = vadd.f32 %v574, %v591
        %v636 = vadd.f32 %v575, %v594
        %v637 = vadd.f32 %v576, %v597
        %v638 = vadd.f32 %v577, %v600
        %v639 = vadd.f32 %v578, %v603
        %v640 = vadd.f32 %v579, %v606
        %v641 = vadd.f32 %v580, %v609
        %v642 = vadd.f32 %v581, %v612
        %v643 = vadd.f32 %v582, %v615
        %v644 = vadd.f32 %v583, %v618
        %v645 = vadd.f32 %v584, %v621
        %vm646 = vcmask 1044480
        %v647 = vrot.slane %v476, 3
        %v648 = vrot.slane %v477, 3
        %v649 = vsel %vm646, %v647, %v648
        %v650 = vrot.slane %v478, 3
        %v651 = vrot.slane %v479, 3
        %v652 = vsel %vm646, %v650, %v651
        %v653 = vrot.slane %v480, 3
        %v654 = vrot.slane %v481, 3
        %v655 = vsel %vm646, %v653, %v654
        %v656 = vrot.slane %v482, 3
        %v657 = vrot.slane %v483, 3
        %v658 = vsel %vm646, %v656, %v657
        %v659 = vrot.slane %v484, 3
        %v660 = vrot.slane %v485, 3
        %v661 = vsel %vm646, %v659, %v660
        %v662 = vrot.slane %v486, 3
        %v663 = vrot.slane %v487, 3
        %v664 = vsel %vm646, %v662, %v663
        %v665 = vrot.slane %v488, 3
        %v666 = vrot.slane %v489, 3
        %v667 = vsel %vm646, %v665, %v666
        %v668 = vrot.slane %v490, 3
        %v669 = vrot.slane %v491, 3
        %v670 = vsel %vm646, %v668, %v669
        %v671 = vrot.slane %v492, 3
        %v672 = vrot.slane %v493, 3
        %v673 = vsel %vm646, %v671, %v672
        %v674 = vrot.slane %v494, 3
        %v675 = vrot.slane %v495, 3
        %v676 = vsel %vm646, %v674, %v675
        %v677 = vrot.slane %v496, 3
        %v678 = vrot.slane %v497, 3
        %v679 = vsel %vm646, %v677, %v678
        %v680 = vrot.slane %v498, 3
        %v681 = vrot.slane %v499, 3
        %v682 = vsel %vm646, %v680, %v681
        %v695 = vadd.f32 %v634, %v649
        %v696 = vadd.f32 %v635, %v652
        %v697 = vadd.f32 %v636, %v655
        %v698 = vadd.f32 %v637, %v658
        %v699 = vadd.f32 %v638, %v661
        %v700 = vadd.f32 %v639, %v664
        %v701 = vadd.f32 %v640, %v667
        %v702 = vadd.f32 %v641, %v670
        %v703 = vadd.f32 %v642, %v673
        %v704 = vadd.f32 %v643, %v676
        %v705 = vadd.f32 %v644, %v679
        %v706 = vadd.f32 %v645, %v682
        %vm707 = vcmask 1043456
        %v708 = vrot.slane %v476, 4
        %v709 = vrot.slane %v477, 4
        %v710 = vsel %vm707, %v708, %v709
        %v711 = vrot.slane %v478, 4
        %v712 = vrot.slane %v479, 4
        %v713 = vsel %vm707, %v711, %v712
        %v714 = vrot.slane %v480, 4
        %v715 = vrot.slane %v481, 4
        %v716 = vsel %vm707, %v714, %v715
        %v717 = vrot.slane %v482, 4
        %v718 = vrot.slane %v483, 4
        %v719 = vsel %vm707, %v717, %v718
        %v720 = vrot.slane %v484, 4
        %v721 = vrot.slane %v485, 4
        %v722 = vsel %vm707, %v720, %v721
        %v723 = vrot.slane %v486, 4
        %v724 = vrot.slane %v487, 4
        %v725 = vsel %vm707, %v723, %v724
        %v726 = vrot.slane %v488, 4
        %v727 = vrot.slane %v489, 4
        %v728 = vsel %vm707, %v726, %v727
        %v729 = vrot.slane %v490, 4
        %v730 = vrot.slane %v491, 4
        %v731 = vsel %vm707, %v729, %v730
        %v732 = vrot.slane %v492, 4
        %v733 = vrot.slane %v493, 4
        %v734 = vsel %vm707, %v732, %v733
        %v735 = vrot.slane %v494, 4
        %v736 = vrot.slane %v495, 4
        %v737 = vsel %vm707, %v735, %v736
        %v738 = vrot.slane %v496, 4
        %v739 = vrot.slane %v497, 4
        %v740 = vsel %vm707, %v738, %v739
        %v741 = vrot.slane %v498, 4
        %v742 = vrot.slane %v499, 4
        %v743 = vsel %vm707, %v741, %v742
        %v756 = vadd.f32 %v695, %v710
        %v757 = vadd.f32 %v696, %v713
        %v758 = vadd.f32 %v697, %v716
        %v759 = vadd.f32 %v698, %v719
        %v760 = vadd.f32 %v699, %v722
        %v761 = vadd.f32 %v700, %v725
        %v762 = vadd.f32 %v701, %v728
        %v763 = vadd.f32 %v702, %v731
        %v764 = vadd.f32 %v703, %v734
        %v765 = vadd.f32 %v704, %v737
        %v766 = vadd.f32 %v705, %v740
        %v767 = vadd.f32 %v706, %v743
        %v768 = vadd.f32 %v756, %v757
        %v769 = vadd.f32 %v757, %v758
        %v770 = vadd.f32 %v758, %v759
        %v771 = vadd.f32 %v759, %v760
        %v772 = vadd.f32 %v760, %v761
        %v773 = vadd.f32 %v761, %v762
        %v774 = vadd.f32 %v762, %v763
        %v775 = vadd.f32 %v763, %v764
        %v776 = vadd.f32 %v768, %v758
        %v777 = vadd.f32 %v769, %v759
        %v778 = vadd.f32 %v770, %v760
        %v779 = vadd.f32 %v771, %v761
        %v780 = vadd.f32 %v772, %v762
        %v781 = vadd.f32 %v773, %v763
        %v782 = vadd.f32 %v774, %v764
        %v783 = vadd.f32 %v775, %v765
        %v784 = vadd.f32 %v776, %v759
        %v785 = vadd.f32 %v777, %v760
        %v786 = vadd.f32 %v778, %v761
        %v787 = vadd.f32 %v779, %v762
        %v788 = vadd.f32 %v780, %v763
        %v789 = vadd.f32 %v781, %v764
        %v790 = vadd.f32 %v782, %v765
        %v791 = vadd.f32 %v783, %v766
        %v792 = vadd.f32 %v784, %v760
        %v793 = vadd.f32 %v785, %v761
        %v794 = vadd.f32 %v786, %v762
        %v795 = vadd.f32 %v787, %v763
        %v796 = vadd.f32 %v788, %v764
        %v797 = vadd.f32 %v789, %v765
        %v798 = vadd.f32 %v790, %v766
        %v799 = vadd.f32 %v791, %v767
        %v800 = vmul.f32 %v792, 0.04
        %v801 = vmul.f32 %v793, 0.04
        %v802 = vmul.f32 %v794, 0.04
        %v803 = vmul.f32 %v795, 0.04
        %v804 = vmul.f32 %v796, 0.04
        %v805 = vmul.f32 %v797, 0.04
        %v806 = vmul.f32 %v798, 0.04
        %v807 = vmul.f32 %v799, 0.04
        %v808 = vmax.f32 %v800, 1e-30
        %v809 = vmax.f32 %v801, 1e-30
        %v810 = vmax.f32 %v802, 1e-30
        %v811 = vmax.f32 %v803, 1e-30
        %v812 = vmax.f32 %v804, 1e-30
        %v813 = vmax.f32 %v805, 1e-30
        %v814 = vmax.f32 %v806, 1e-30
        %v815 = vmax.f32 %v807, 1e-30
        %v816 = vlog2.pop %v808
        %v817 = vmul.f32 %v816, 0.6931472
        %v818 = vlog2.pop %v809
        %v819 = vmul.f32 %v818, 0.6931472
        %v820 = vlog2.pop %v810
        %v821 = vmul.f32 %v820, 0.6931472
        %v822 = vlog2.pop %v811
        %v823 = vmul.f32 %v822, 0.6931472
        %v824 = vlog2.pop %v812
        %v825 = vmul.f32 %v824, 0.6931472
        %v826 = vlog2.pop %v813
        %v827 = vmul.f32 %v826, 0.6931472
        %v828 = vlog2.pop %v814
        %v829 = vmul.f32 %v828, 0.6931472
        %v830 = vlog2.pop %v815
        %v831 = vmul.f32 %v830, 0.6931472
        %v832 = vmul.f32 %v817, 0.4
        %v833 = vmul.f32 %v819, 0.4
        %v834 = vmul.f32 %v821, 0.4
        %v835 = vmul.f32 %v823, 0.4
        %v836 = vmul.f32 %v825, 0.4
        %v837 = vmul.f32 %v827, 0.4
        %v838 = vmul.f32 %v829, 0.4
        %v839 = vmul.f32 %v831, 0.4
        %v840 = vmul.f32 %v832, 1.442695
        %v841 = vpow.pop %v840
        %v842 = vmul.f32 %v833, 1.442695
        %v843 = vpow.pop %v842
        %v844 = vmul.f32 %v834, 1.442695
        %v845 = vpow.pop %v844
        %v846 = vmul.f32 %v835, 1.442695
        %v847 = vpow.pop %v846
        %v848 = vmul.f32 %v836, 1.442695
        %v849 = vpow.pop %v848
        %v850 = vmul.f32 %v837, 1.442695
        %v851 = vpow.pop %v850
        %v852 = vmul.f32 %v838, 1.442695
        %v853 = vpow.pop %v852
        %v854 = vmul.f32 %v839, 1.442695
        %v855 = vpow.pop %v854
        %v856 = vmul.f32 %v841, 0.5
        %v857 = vmul.f32 %v843, 0.5
        %v858 = vmul.f32 %v845, 0.5
        %v859 = vmul.f32 %v847, 0.5
        %v860 = vmul.f32 %v849, 0.5
        %v861 = vmul.f32 %v851, 0.5
        %v862 = vmul.f32 %v853, 0.5
        %v863 = vmul.f32 %v855, 0.5
        %v864 = vmul.f32 %v144, 0.5
        %v865 = vmul.f32 %v145, 0.5
        %v866 = vmul.f32 %v146, 0.5
        %v867 = vmul.f32 %v147, 0.5
        %v868 = vmul.f32 %v148, 0.5
        %v869 = vmul.f32 %v149, 0.5
        %v870 = vmul.f32 %v150, 0.5
        %v871 = vmul.f32 %v151, 0.5
        %v872 = vmul.f32 %v152, 0.5
        %v873 = vmul.f32 %v153, 0.5
        %v874 = vmul.f32 %v154, 0.5
        %v875 = vmul.f32 %v155, 0.5
        %v876 = vmul.f32 %v156, 0.5
        %v877 = vmul.f32 %v157, 0.5
        %v878 = vmul.f32 %v158, 0.5
        %v879 = vmul.f32 %v159, 0.5
        %v896 = vrot.slane %v864, 2
        %v897 = vrot.slane %v865, 2
        %v898 = vsel %vm585, %v896, %v897
        %v899 = vrot.slane %v866, 2
        %v900 = vrot.slane %v867, 2
        %v901 = vsel %vm585, %v899, %v900
        %v902 = vrot.slane %v868, 2
        %v903 = vrot.slane %v869, 2
        %v904 = vsel %vm585, %v902, %v903
        %v905 = vrot.slane %v870, 2
        %v906 = vrot.slane %v871, 2
        %v907 = vsel %vm585, %v905, %v906
        %v908 = vrot.slane %v872, 2
        %v909 = vrot.slane %v873, 2
        %v910 = vsel %vm585, %v908, %v909
        %v911 = vrot.slane %v874, 2
        %v912 = vrot.slane %v875, 2
        %v913 = vsel %vm585, %v911, %v912
        %v914 = vrot.slane %v876, 2
        %v915 = vrot.slane %v877, 2
        %v916 = vsel %vm585, %v914, %v915
        %v917 = vrot.slane %v878, 2
        %v918 = vrot.slane %v879, 2
        %v919 = vsel %vm585, %v917, %v918
        %v928 = vadd.f32 %v856, %v898
        %v929 = vadd.f32 %v857, %v901
        %v930 = vadd.f32 %v858, %v904
        %v931 = vadd.f32 %v859, %v907
        %v932 = vadd.f32 %v860, %v910
        %v933 = vadd.f32 %v861, %v913
        %v934 = vadd.f32 %v862, %v916
        %v935 = vadd.f32 %v863, %v919
        %vm936 = vcmask 261120
        %937 = vst.msk [vmem:[%s131] sm:$0xff] %vm936, %v928
        %938 = vst.msk [vmem:[%s131 + $0x8] sm:$0xff] %vm936, %v929
        %939 = vst.msk [vmem:[%s131 + $0x10] sm:$0xff] %vm936, %v930
        %940 = vst.msk [vmem:[%s131 + $0x18] sm:$0xff] %vm936, %v931
        %941 = vst.msk [vmem:[%s131 + $0x20] sm:$0xff] %vm936, %v932
        %942 = vst.msk [vmem:[%s131 + $0x28] sm:$0xff] %vm936, %v933
        %943 = vst.msk [vmem:[%s131 + $0x30] sm:$0xff] %vm936, %v934
        %944 = vst.msk [vmem:[%s131 + $0x38] sm:$0xff] %vm936, %v935
        %s945 = sand.u32 %s65, 1
        %s946 = scalar_lea.sflag [#allocation3], %s945
        %s947 = sand.u32 %s65, 1
        %s948 = smul.addr %s947, 64
        %s949 = scalar_lea.vmem [#allocation2], %s948
        // Predicated region
        $region25: #{tpu_custom_call.1} parent=23 // pred_check
          %p950 = pneg %p75
        $region26: #{tpu_custom_call.1} parent=23 // pred_check_branch
          %952 = sbr.rel (%p950) target = $region28
        $region27: #{tpu_custom_call.1} parent=23 // pred_region
          %954 = vsyncadd %s946, 0
          %s955 = smul.addr %s19, 8
          %s956 = sadd.s32 %s20, %s955
          %s957 = smul.addr %s956, 8
          %s958 = scalar_lea.hbm %s1, %s957
          %s959 = sshll.u32 %s949, 4
          %s960 = int_to_ptr.vmem [resolvable:$true] %s959
          %s961 = sshll.u32 %s958, 4
          %s962 = int_to_ptr.hbm [resolvable:$true] %s961
          %967 = dma.vmem_to_hbm [thread:$0]  %s960, 1024, %s962, %s946, 128, 128, 8
        $region28: #{tpu_custom_call.1} parent=23 // pred_fallthru
          _
      $region24: #{tpu_custom_call.1} parent=5 // pred_fallthru
        _
      %p968 = scmp.le.s32.totalorder 2, %s10
      // Predicated region
      $region29: #{tpu_custom_call.1} parent=5 // pred_check
        %p969 = pneg %p968
      $region30: #{tpu_custom_call.1} parent=5 // pred_check_branch
        %971 = sbr.rel (%p969) target = $region32
      $region31: #{tpu_custom_call.1} parent=5 // pred_region
        %s972 = ssub.s32 %s10, 2
        // Predicated region
        $region33: #{tpu_custom_call.1} parent=31 // pred_check
          %p973 = pneg %p81
        $region34: #{tpu_custom_call.1} parent=31 // pred_check_branch
          %975 = sbr.rel (%p973) target = $region36
        $region35: #{tpu_custom_call.1} parent=31 // pred_region
          %s976 = sand.u32 %s66, 1
          %s977 = scalar_lea.sflag [#allocation3], %s976
          %s978 = sand.u32 %s66, 1
          %s979 = smul.addr %s978, 64
          %s980 = scalar_lea.vmem [#allocation2], %s979
          %982 = dma.done %s977, 1024
        $region36: #{tpu_custom_call.1} parent=31 // pred_fallthru
          _
      $region32: #{tpu_custom_call.1} parent=5 // pred_fallthru
        _
    $region6: #{tpu_custom_call.1} parent=1 // loop_footer
      %s14 = sadd.s32 1, %s10
    $region7: #{tpu_custom_call.1} parent=1 // loop_footer_branch
      %9 = sbr.rel target = $region3
    $region8: #{tpu_custom_call.1} parent=1 // loop_exit
      _
    %983 = vsyncpa [#allocation3], 1
    %s984 = scalar_lea.sflag [#allocation3], 1
    %985 = vsyncpa %s984, 1

</llo_original>
